<compile_context>
chip_gen: v5e
topology: v5e:2x2
jax: 0.10.0
libtpu: 0.0.40
codegen_flags: <defaults>
</compile_context>

<pallas_src>
import functools

import jax
import jax.numpy as jnp
from jax.experimental import pallas as pl
from jax.experimental.pallas import tpu as pltpu

_LANE = 128
_SUBLANE = 8
_VMEM_BLOCK_BUDGET = 12 * 1024 * 1024  # bytes; conservative for v7x (64 MiB/TC)
_MAX_ROW_TILE = 2048


def _round_up(x, m):
    return -(-x // m) * m


def _pick_row_tile(rows, widths_and_itemsizes):
    """Largest row tile (multiple of 8) whose double-buffered, lane-padded VMEM
    footprint fits the budget, while keeping >= 2 grid steps when possible so
    the 'parallel' row axis can shard across both TensorCores on v7x."""
    per_row = 0
    for width, itemsize in widths_and_itemsizes:
        # x2 for double-buffering; lane dim padded to 128 in VMEM.
        per_row += 2 * itemsize * _round_up(width, _LANE)
    tm = (_VMEM_BLOCK_BUDGET // per_row) // _SUBLANE * _SUBLANE
    tm = max(_SUBLANE, min(_MAX_ROW_TILE, tm))
    if rows <= _SUBLANE:
        # Single tiny block; block dim equals the full array dim -> always legal.
        return rows
    # Keep at least two grid steps for megacore sharding.
    tm = min(tm, max(_SUBLANE, _round_up(-(-rows // 2), _SUBLANE)))
    return tm


def _resample_kernel(ring_ref, corners_ref, rs_ring_ref, rs_corners_ref, *, freq):
    # freq-fold repeat along the lane axis — exactly torch.cat([x]*freq, dim=-1).
    # Compute (lane rotates/selects) is tiny and hidden under the HBM writeback.
    rs_ring_ref[...] = jnp.tile(ring_ref[...], (1, freq))
    rs_corners_ref[...] = jnp.tile(corners_ref[...], (1, freq))


def neighbor_resample_uniform(ring_n, neighbor_corners, num_samples_per_neighbor=8):
    """Pallas implementation of NeighborResampleUniform.forward.

    Args:
      ring_n:            [num_meshes, num_faces, num_neighbor]
      neighbor_corners:  [num_meshes, num_faces, num_neighbor, 3, 3]
      num_samples_per_neighbor: resampling frequency per neighbor

    Returns:
      rs_ring_n:           [num_meshes, num_faces, num_neighbor * f]
      rs_neighbor_corners: [num_meshes, num_faces, num_neighbor * f, 3, 3]
    """
    freq = int(num_samples_per_neighbor)
    M, F, N = ring_n.shape
    assert neighbor_corners.shape == (M, F, N, 3, 3), neighbor_corners.shape

    rows = M * F
    ring_w, corners_w = N, N * 9
    ring_ow, corners_ow = N * freq, N * 9 * freq

    ring2d = ring_n.reshape(rows, ring_w)
    corners2d = neighbor_corners.reshape(rows, corners_w)

    ring_bpe = jnp.dtype(ring_n.dtype).itemsize
    cor_bpe = jnp.dtype(neighbor_corners.dtype).itemsize

    tm = _pick_row_tile(
        rows,
        [(ring_w, ring_bpe), (corners_w, cor_bpe),
         (ring_ow, ring_bpe), (corners_ow, cor_bpe)],
    )
    grid_m = pl.cdiv(rows, tm)

    # Pure memcpy-class op: bytes only, no flops.
    bytes_accessed = rows * (ring_w * ring_bpe + corners_w * cor_bpe) * (1 + freq)

    kernel = functools.partial(_resample_kernel, freq=freq)

    rs_ring2d, rs_corners2d = pl.pallas_call(
        kernel,
        out_shape=(
            jax.ShapeDtypeStruct((rows, ring_ow), ring_n.dtype),
            jax.ShapeDtypeStruct((rows, corners_ow), neighbor_corners.dtype),
        ),
        grid=(grid_m,),
        in_specs=[
            pl.BlockSpec((tm, ring_w), lambda i: (i, 0)),
            pl.BlockSpec((tm, corners_w), lambda i: (i, 0)),
        ],
        out_specs=(
            pl.BlockSpec((tm, ring_ow), lambda i: (i, 0)),
            pl.BlockSpec((tm, corners_ow), lambda i: (i, 0)),
        ),
        compiler_params=pltpu.CompilerParams(
            dimension_semantics=("parallel",),
            vmem_limit_bytes=32 * 1024 * 1024,
        ),
        cost_estimate=pl.CostEstimate(
            flops=0, transcendentals=0, bytes_accessed=bytes_accessed
        ),
    )(ring2d, corners2d)

    rs_ring_n = rs_ring2d.reshape(M, F, ring_ow)
    rs_neighbor_corners = rs_corners2d.reshape(M, F, ring_ow, 3, 3)
    return rs_ring_n, rs_neighbor_corners


if __name__ == "__main__":
    key = jax.random.PRNGKey(0)
    k1, k2 = jax.random.split(key)

    # Small shapes consistent with the module: num_meshes=2, num_faces=16,
    # num_neighbor=6 (between 3 and 12), resampling_frequency=8 (default).
    M, F, N = 2, 16, 6
    freq = 8

    ring_n = jax.random.randint(k1, (M, F, N), minval=0, maxval=F, dtype=jnp.int32)
    neighbor_corners = jax.random.normal(k2, (M, F, N, 3, 3), dtype=jnp.float32)

    rs_ring_n, rs_neighbor_corners = neighbor_resample_uniform(
        ring_n, neighbor_corners, num_samples_per_neighbor=freq
    )
    jax.block_until_ready((rs_ring_n, rs_neighbor_corners))

    # Reference (pure JAX) — mirrors torch.cat([x]*freq, dim=2) exactly.
    ref_ring = jnp.concatenate([ring_n] * freq, axis=2)
    ref_corners = jnp.concatenate([neighbor_corners] * freq, axis=2)

    assert rs_ring_n.shape == (M, F, N * freq)
    assert rs_neighbor_corners.shape == (M, F, N * freq, 3, 3)
    assert rs_ring_n.dtype == ring_n.dtype
    assert rs_neighbor_corners.dtype == neighbor_corners.dtype
    assert bool(jnp.all(rs_ring_n == ref_ring))
    assert bool(jnp.all(rs_neighbor_corners == ref_corners))

    print("KERNEL_OK")
</pallas_src>

<mosaic_0001>
module attributes {stable_mosaic.version = 11 : i64} {
  func.func @_resample_kernel(%arg0: i32, %arg1: memref<16x6xi32, #tpu.memory_space<vmem>>, %arg2: memref<16x54xf32, #tpu.memory_space<vmem>>, %arg3: memref<16x48xi32, #tpu.memory_space<vmem>>, %arg4: memref<16x432xf32, #tpu.memory_space<vmem>>) attributes {dimension_semantics = [#tpu.dimension_semantics<parallel>], iteration_bounds = array<i64: 2>, scalar_prefetch = 0 : i64, scratch_operands = 0 : i64, tpu.core_type = #tpu.core_type<tc>, window_params = [{transform_indices = @transform_0, window_bounds = array<i64: 16, 6>}, {transform_indices = @transform_1, window_bounds = array<i64: 16, 54>}, {transform_indices = @transform_2, window_bounds = array<i64: 16, 48>}, {transform_indices = @transform_3, window_bounds = array<i64: 16, 432>}]} {
    %c0 = arith.constant 0 : index
    %c0_0 = arith.constant 0 : index
    %0 = vector.load %arg1[%c0, %c0_0] : memref<16x6xi32, #tpu.memory_space<vmem>>, vector<16x6xi32>
    %1 = tpu.concatenate %0, %0, %0, %0, %0, %0, %0, %0 in 1 : vector<16x6xi32>, vector<16x6xi32>, vector<16x6xi32>, vector<16x6xi32>, vector<16x6xi32>, vector<16x6xi32>, vector<16x6xi32>, vector<16x6xi32> -> vector<16x48xi32>
    %c0_1 = arith.constant 0 : index
    %c0_2 = arith.constant 0 : index
    %2 = vector.load %arg3[%c0_1, %c0_2] : memref<16x48xi32, #tpu.memory_space<vmem>>, vector<16x48xi32>
    tpu.vector_store %arg3[%c0_1, %c0_2], %1 {strides = array<i32>} : memref<16x48xi32, #tpu.memory_space<vmem>>, vector<16x48xi32>,
    %c0_3 = arith.constant 0 : index
    %c0_4 = arith.constant 0 : index
    %3 = vector.load %arg2[%c0_3, %c0_4] : memref<16x54xf32, #tpu.memory_space<vmem>>, vector<16x54xf32>
    %4 = tpu.concatenate %3, %3, %3, %3, %3, %3, %3, %3 in 1 : vector<16x54xf32>, vector<16x54xf32>, vector<16x54xf32>, vector<16x54xf32>, vector<16x54xf32>, vector<16x54xf32>, vector<16x54xf32>, vector<16x54xf32> -> vector<16x432xf32>
    %c0_5 = arith.constant 0 : index
    %c0_6 = arith.constant 0 : index
    %5 = vector.load %arg4[%c0_5, %c0_6] : memref<16x432xf32, #tpu.memory_space<vmem>>, vector<16x432xf32>
    tpu.vector_store %arg4[%c0_5, %c0_6], %4 {strides = array<i32>} : memref<16x432xf32, #tpu.memory_space<vmem>>, vector<16x432xf32>,
    return
  }
  func.func @transform_0(%arg0: i32) -> (i32, i32) {
    %c0_i32 = arith.constant 0 : i32
    %c0_i32_0 = arith.constant 0 : i32
    return %arg0, %c0_i32 : i32, i32
  }
  func.func @transform_1(%arg0: i32) -> (i32, i32) {
    %c0_i32 = arith.constant 0 : i32
    %c0_i32_0 = arith.constant 0 : i32
    return %arg0, %c0_i32 : i32, i32
  }
  func.func @transform_2(%arg0: i32) -> (i32, i32) {
    %c0_i32 = arith.constant 0 : i32
    %c0_i32_0 = arith.constant 0 : i32
    return %arg0, %c0_i32 : i32, i32
  }
  func.func @transform_3(%arg0: i32) -> (i32, i32) {
    %c0_i32 = arith.constant 0 : i32
    %c0_i32_0 = arith.constant 0 : i32
    return %arg0, %c0_i32 : i32, i32
  }
}

</mosaic_0001>

<llo_original>
// kernel: tpu_custom_call.1
$region0: #{tpu_custom_call.1}
  #allocation0 [shape = 'u32[]', space=smem, size = 0x4, offset = 0x4, fixed_abs, tag = 'smem constant byte address 0x4 - core index']
  #allocation1 [shape = 'u32[72,128]{1,0:T(1,128)}', space=vmem, size = 0x9000, scoped, tag = 'internal scratch']
  %s0 = inlined_call_operand.vmem [shape: s32[32,6], index: 0, kind: input, shape index: {}]
  %s1 = inlined_call_operand.vmem [shape: f32[32,54], index: 1, kind: input, shape index: {}]
  %s2 = inlined_call_operand.hbm [shape: s32[32,48], index: 2, kind: output, shape index: {0}]
  %s3 = inlined_call_operand.hbm [shape: f32[32,432], index: 3, kind: output, shape index: {1}]
  %4 = xla_tuple %s2, %s3
  %s5 = sld [smem:[#allocation0]]
  $region49: #{tpu_custom_call.1} parent=0
    _
  %s7 = ssub.s32 1, %s5
  %s8 = scalar_select 0, %s7, %s5
  $region1: #{tpu_custom_call.1} parent=0
    #allocation2 [shape = 'u8[16384]{0}', space=vmem, size = 0x4000, scoped, tag = 'output window, operand 0']
    #allocation3 [shape = 's32[2]{0}', space=sflag, size = 0x8, scoped, tag = 'scoped memory for tpu_custom_call.1']
    #allocation4 [shape = 'u8[65536]{0}', space=vmem, size = 0x10000, scoped, tag = 'output window, operand 1']
    #allocation5 [shape = 's32[2]{0}', space=sflag, size = 0x8, scoped, tag = 'scoped memory for tpu_custom_call.1']
    %9 = vsyncpa [#allocation3], 0
    %s10 = scalar_lea.sflag [#allocation3], 1
    %11 = vsyncpa %s10, 0
    %12 = vsyncpa [#allocation5], 0
    %s13 = scalar_lea.sflag [#allocation5], 1
    %14 = vsyncpa %s13, 0
    loop: start=0, step=1, limit=4
    $region2: #{tpu_custom_call.1} parent=1 // loop_pre_header
      _
    $region3: #{tpu_custom_call.1} parent=1 // loop_header
      %s16 = sphi 0, %s20
      %p17 = scmp.ge.s32.totalorder %s16, 4
      %s26 = sphi 0, %s28
      %s29 = sphi 0, %s26
      %s30 = sphi 0, %s29
      %s46 = sphi 0, %s30
      %s52 = sphi 0, %s54
      %s55 = sphi 0, %s52
      %s56 = sphi 0, %s55
      %s72 = sphi 0, %s56
      %s78 = sphi 0, %s80
      %s81 = sphi 0, %s78
      %s82 = sphi 0, %s81
      %s98 = sphi 0, %s82
      %s104 = sphi 0, %s106
      %s107 = sphi 0, %s104
      %s108 = sphi 0, %s107
      %s124 = sphi 0, %s108
    $region4: #{tpu_custom_call.1} parent=1 // loop_header_branch
      %19 = sbr.rel (%p17) target = $region8
    $region5: #{tpu_custom_call.1} parent=1 // loop_body
      %s21 = ssub.s32 %s16, 1
      %s22 = ssub.s32 %s16, 2
      %s23 = sadd.s32 %s16, 1
      %s24 = ssub.s32 %s16, %s23
      %p25 = scmp.eq.s32.totalorder %s24, 0
      %s27 = sadd.s32 %s26, 1
      %s28 = scalar_select %p25, %s26, %s27
      %p31 = pneg %p25
      %p32 = scmp.eq.s32.totalorder %s16, 1
      %p33 = por %p31, %p32
      %p34 = scmp.ne.s32.totalorder %s26, %s29
      %p35 = scmp.eq.s32.totalorder %s16, 0
      %p36 = por %p34, %p35
      %p37 = scmp.ne.s32.totalorder %s26, %s29
      %p38 = scmp.eq.s32.totalorder %s21, 1
      %p39 = por %p37, %p38
      %p40 = scmp.ne.s32.totalorder %s29, %s30
      %p41 = scmp.eq.s32.totalorder %s21, 0
      %p42 = por %p40, %p41
      %p43 = scmp.ne.s32.totalorder %s29, %s30
      %p44 = scmp.eq.s32.totalorder %s22, 1
      %p45 = por %p43, %p44
      %p47 = scmp.ne.s32.totalorder %s30, %s46
      %p48 = scmp.eq.s32.totalorder %s22, 0
      %p49 = por %p47, %p48
      %s50 = ssub.s32 %s16, %s23
      %p51 = scmp.eq.s32.totalorder %s50, 0
      %s53 = sadd.s32 %s52, 1
      %s54 = scalar_select %p51, %s52, %s53
      %p57 = pneg %p51
      %p58 = scmp.eq.s32.totalorder %s16, 1
      %p59 = por %p57, %p58
      %p60 = scmp.ne.s32.totalorder %s52, %s55
      %p61 = scmp.eq.s32.totalorder %s16, 0
      %p62 = por %p60, %p61
      %p63 = scmp.ne.s32.totalorder %s52, %s55
      %p64 = scmp.eq.s32.totalorder %s21, 1
      %p65 = por %p63, %p64
      %p66 = scmp.ne.s32.totalorder %s55, %s56
      %p67 = scmp.eq.s32.totalorder %s21, 0
      %p68 = por %p66, %p67
      %p69 = scmp.ne.s32.totalorder %s55, %s56
      %p70 = scmp.eq.s32.totalorder %s22, 1
      %p71 = por %p69, %p70
      %p73 = scmp.ne.s32.totalorder %s56, %s72
      %p74 = scmp.eq.s32.totalorder %s22, 0
      %p75 = por %p73, %p74
      %s76 = ssub.s32 %s16, %s23
      %p77 = scmp.eq.s32.totalorder %s76, 0
      %s79 = sadd.s32 %s78, 1
      %s80 = scalar_select %p77, %s78, %s79
      %p83 = pneg %p77
      %p84 = scmp.eq.s32.totalorder %s16, 1
      %p85 = por %p83, %p84
      %p86 = scmp.ne.s32.totalorder %s78, %s81
      %p87 = scmp.eq.s32.totalorder %s16, 0
      %p88 = por %p86, %p87
      %p89 = scmp.ne.s32.totalorder %s78, %s81
      %p90 = scmp.eq.s32.totalorder %s21, 1
      %p91 = por %p89, %p90
      %p92 = scmp.ne.s32.totalorder %s81, %s82
      %p93 = scmp.eq.s32.totalorder %s21, 0
      %p94 = por %p92, %p93
      %p95 = scmp.ne.s32.totalorder %s81, %s82
      %p96 = scmp.eq.s32.totalorder %s22, 1
      %p97 = por %p95, %p96
      %p99 = scmp.ne.s32.totalorder %s82, %s98
      %p100 = scmp.eq.s32.totalorder %s22, 0
      %p101 = por %p99, %p100
      %s102 = ssub.s32 %s16, %s23
      %p103 = scmp.eq.s32.totalorder %s102, 0
      %s105 = sadd.s32 %s104, 1
      %s106 = scalar_select %p103, %s104, %s105
      %p109 = pneg %p103
      %p110 = scmp.eq.s32.totalorder %s16, 1
      %p111 = por %p109, %p110
      %p112 = scmp.ne.s32.totalorder %s104, %s107
      %p113 = scmp.eq.s32.totalorder %s16, 0
      %p114 = por %p112, %p113
      %p115 = scmp.ne.s32.totalorder %s104, %s107
      %p116 = scmp.eq.s32.totalorder %s21, 1
      %p117 = por %p115, %p116
      %p118 = scmp.ne.s32.totalorder %s107, %s108
      %p119 = scmp.eq.s32.totalorder %s21, 0
      %p120 = por %p118, %p119
      %p121 = scmp.ne.s32.totalorder %s107, %s108
      %p122 = scmp.eq.s32.totalorder %s22, 1
      %p123 = por %p121, %p122
      %p125 = scmp.ne.s32.totalorder %s108, %s124
      %p126 = scmp.eq.s32.totalorder %s22, 0
      %p127 = por %p125, %p126
      %p128 = scmp.le.s32.totalorder 1, %s16
      %p129 = scmp.lt.s32.totalorder %s16, 3
      %p130 = pnand %p128, %p129
      %p131 = pneg %p130
      // Predicated region
      $region9: #{tpu_custom_call.1} parent=5 // pred_check
        _
      $region10: #{tpu_custom_call.1} parent=5 // pred_check_branch
        %133 = sbr.rel (%p130) target = $region12
      $region11: #{tpu_custom_call.1} parent=5 // pred_region
        %s134 = ssub.s32 %s16, 1
      $region12: #{tpu_custom_call.1} parent=5 // pred_fallthru
        _
      %p135 = scmp.lt.s32.totalorder %s16, 2
      // Predicated region
      $region13: #{tpu_custom_call.1} parent=5 // pred_check
        %p136 = pneg %p135
      $region14: #{tpu_custom_call.1} parent=5 // pred_check_branch
        %138 = sbr.rel (%p136) target = $region16
      $region15: #{tpu_custom_call.1} parent=5 // pred_region
        // Predicated region
        $region17: #{tpu_custom_call.1} parent=15 // pred_check
          %p139 = pneg %p36
        $region18: #{tpu_custom_call.1} parent=15 // pred_check_branch
          %141 = sbr.rel (%p139) target = $region20
        $region19: #{tpu_custom_call.1} parent=15 // pred_region
          %s142 = smul.u32 2, %s16
          %p143 = scmp.lt.s32.totalorder %s142, 3
          %s144 = scalar_select %p143, %s142, 3
          %s145 = smul.addr %s144, 8
          %s146 = scalar_lea.vmem %s0, %s145
          %s147 = smul.u32 2, %s16
        $region20: #{tpu_custom_call.1} parent=15 // pred_fallthru
          _
        // Predicated region
        $region21: #{tpu_custom_call.1} parent=15 // pred_check
          %p148 = pneg %p62
        $region22: #{tpu_custom_call.1} parent=15 // pred_check_branch
          %150 = sbr.rel (%p148) target = $region24
        $region23: #{tpu_custom_call.1} parent=15 // pred_region
          %s151 = smul.u32 2, %s16
          %p152 = scmp.lt.s32.totalorder %s151, 3
          %s153 = scalar_select %p152, %s151, 3
          %s154 = smul.addr %s153, 8
          %s155 = scalar_lea.vmem %s1, %s154
          %s156 = smul.u32 2, %s16
        $region24: #{tpu_custom_call.1} parent=15 // pred_fallthru
          _
      $region16: #{tpu_custom_call.1} parent=5 // pred_fallthru
        _
      %p157 = scmp.le.s32.totalorder 1, %s16
      %p158 = scmp.lt.s32.totalorder %s16, 3
      %p159 = pnand %p157, %p158
      %p160 = pneg %p159
      // Predicated region
      $region25: #{tpu_custom_call.1} parent=5 // pred_check
        _
      $region26: #{tpu_custom_call.1} parent=5 // pred_check_branch
        %162 = sbr.rel (%p159) target = $region28
      $region27: #{tpu_custom_call.1} parent=5 // pred_region
        %s163 = ssub.s32 %s16, 1
        %s164 = smul.u32 2, %s21
        %p165 = scmp.lt.s32.totalorder %s164, 3
        %s166 = scalar_select %p165, %s164, 3
        %s167 = smul.addr %s166, 8
        %s168 = scalar_lea.vmem %s0, %s167
        %p169 = pneg %p42
        %p170 = pneg %p39
        %s171 = smul.u32 2, %s21
        %p172 = scmp.lt.s32.totalorder %s171, 3
        %s173 = scalar_select %p172, %s171, 3
        %s174 = smul.addr %s173, 8
        %s175 = scalar_lea.vmem %s1, %s174
        %p176 = pneg %p68
        %p177 = pneg %p65
        %p178 = pneg %p94
        %p179 = pneg %p91
        %s180 = sand.u32 %s81, 1
        %s181 = scalar_lea.sflag [#allocation3], %s180
        %s182 = sand.u32 %s81, 1
        %s183 = smul.addr %s182, 16
        %s184 = scalar_lea.vmem [#allocation2], %s183
        %p185 = pneg %p120
        %p186 = pneg %p117
        %s187 = sand.u32 %s107, 1
        %s188 = scalar_lea.sflag [#allocation5], %s187
        %s189 = sand.u32 %s107, 1
        %s190 = smul.addr %s189, 64
        %s191 = scalar_lea.vmem [#allocation4], %s190
        %s192 = smul.u32 2, %s21
        %p193 = scmp.lt.s32.totalorder %s192, 3
        %s194 = scalar_select %p193, %s192, 3
        %s195 = smul.addr %s194, 8
        %s196 = scalar_lea.vmem %s0, %s195
        %s197 = smul.u32 2, %s21
        %s198 = smul.u32 2, %s21
        %p199 = scmp.lt.s32.totalorder %s198, 3
        %s200 = scalar_select %p199, %s198, 3
        %s201 = smul.addr %s200, 8
        %s202 = scalar_lea.vmem %s1, %s201
        %s203 = smul.u32 2, %s21
        %s204 = smul.u32 2, %s21
        %s205 = smul.u32 2, %s21
        %v206 = vld [vmem:[%s196] sm:$0xff]
        %v207 = vld [vmem:[%s196 + $0x8] sm:$0xff]
        %208 = vrot.lane.b32.xlu0 %v206, 6
        %v209 = vpop.permute.xlu0 %208
        %210 = vrot.lane.b32.xlu0 %v207, 6
        %v211 = vpop.permute.xlu0 %210
        %212 = vrot.lane.b32.xlu0 %v206, 12
        %v213 = vpop.permute.xlu0 %212
        %214 = vrot.lane.b32.xlu0 %v207, 12
        %v215 = vpop.permute.xlu0 %214
        %216 = vrot.lane.b32.xlu0 %v206, 18
        %v217 = vpop.permute.xlu0 %216
        %218 = vrot.lane.b32.xlu0 %v207, 18
        %v219 = vpop.permute.xlu0 %218
        %220 = vrot.lane.b32.xlu0 %v206, 24
        %v221 = vpop.permute.xlu0 %220
        %222 = vrot.lane.b32.xlu0 %v207, 24
        %v223 = vpop.permute.xlu0 %222
        %224 = vrot.lane.b32.xlu0 %v206, 30
        %v225 = vpop.permute.xlu0 %224
        %226 = vrot.lane.b32.xlu0 %v207, 30
        %v227 = vpop.permute.xlu0 %226
        %228 = vrot.lane.b32.xlu0 %v206, 36
        %v229 = vpop.permute.xlu0 %228
        %230 = vrot.lane.b32.xlu0 %v207, 36
        %v231 = vpop.permute.xlu0 %230
        %232 = vrot.lane.b32.xlu0 %v206, 42
        %v233 = vpop.permute.xlu0 %232
        %234 = vrot.lane.b32.xlu0 %v207, 42
        %v235 = vpop.permute.xlu0 %234
        %vm236 = vcmask 48128
        %v237 = vsel %vm236, %v206, %v209
        %v238 = vsel %vm236, %v207, %v211
        %vm239 = vcmask 97280
        %v240 = vsel %vm239, %v237, %v213
        %v241 = vsel %vm239, %v238, %v215
        %vm242 = vcmask 146432
        %v243 = vsel %vm242, %v240, %v217
        %v244 = vsel %vm242, %v241, %v219
        %vm245 = vcmask 195584
        %v246 = vsel %vm245, %v243, %v221
        %v247 = vsel %vm245, %v244, %v223
        %vm248 = vcmask 244736
        %v249 = vsel %vm248, %v246, %v225
        %v250 = vsel %vm248, %v247, %v227
        %vm251 = vcmask 293888
        %v252 = vsel %vm251, %v249, %v229
        %v253 = vsel %vm251, %v250, %v231
        %vm254 = vcmask 343040
        %v255 = vsel %vm254, %v252, %v233
        %v256 = vsel %vm254, %v253, %v235
        %vm257 = vcmask 392192
        %258 = vst.msk [vmem:[%s184] sm:$0xff] %vm257, %v255
        %259 = vst.msk [vmem:[%s184 + $0x8] sm:$0xff] %vm257, %v256
        %v260 = vld [vmem:[%s202] sm:$0xff]
        %v261 = vld [vmem:[%s202 + $0x8] sm:$0xff]
        %264 = vrot.lane.b32.xlu0 %v260, 54
        %v265 = vpop.permute.xlu0 %264
        %266 = vrot.lane.b32.xlu0 %v261, 54
        %v267 = vpop.permute.xlu0 %266
        %270 = vrot.lane.b32.xlu0 %v260, 108
        %v271 = vpop.permute.xlu0 %270
        %272 = vrot.lane.b32.xlu0 %v261, 108
        %v273 = vpop.permute.xlu0 %272
        %276 = vrot.lane.b32.xlu0 %v260, 34
        %v277 = vpop.permute.xlu0 %276
        %278 = vrot.lane.b32.xlu0 %v261, 34
        %v279 = vpop.permute.xlu0 %278
        %282 = vrot.lane.b32.xlu0 %v260, 88
        %v283 = vpop.permute.xlu0 %282
        %284 = vrot.lane.b32.xlu0 %v261, 88
        %v285 = vpop.permute.xlu0 %284
        %288 = vrot.lane.b32.xlu0 %v260, 14
        %v289 = vpop.permute.xlu0 %288
        %290 = vrot.lane.b32.xlu0 %v261, 14
        %v291 = vpop.permute.xlu0 %290
        %294 = vrot.lane.b32.xlu0 %v260, 68
        %v295 = vpop.permute.xlu0 %294
        %296 = vrot.lane.b32.xlu0 %v261, 68
        %v297 = vpop.permute.xlu0 %296
        %300 = vrot.lane.b32.xlu0 %v260, 122
        %v301 = vpop.permute.xlu0 %300
        %302 = vrot.lane.b32.xlu0 %v261, 122
        %v303 = vpop.permute.xlu0 %302
        %vm306 = vcmask 441344
        %v307 = vsel %vm306, %v260, %v265
        %v308 = vsel %vm306, %v261, %v267
        %vm309 = vcmask 883712
        %v310 = vsel %vm309, %v307, %v271
        %v311 = vsel %vm309, %v308, %v273
        %vm312 = vcmask 277504
        %v313 = vsel %vm312, %v271, %v277
        %v314 = vsel %vm312, %v273, %v279
        %vm315 = vcmask 719872
        %v316 = vsel %vm315, %v313, %v283
        %v317 = vsel %vm315, %v314, %v285
        %vm318 = vcmask 113664
        %v319 = vsel %vm318, %v283, %v289
        %v320 = vsel %vm318, %v285, %v291
        %vm321 = vcmask 556032
        %v322 = vsel %vm321, %v319, %v295
        %v323 = vsel %vm321, %v320, %v297
        %vm324 = vcmask 998400
        %v325 = vsel %vm324, %v322, %v301
        %v326 = vsel %vm324, %v323, %v303
        %327 = vst [vmem:[%s191] sm:$0xff] %v310
        %328 = vst [vmem:[%s191 + $0x8] sm:$0xff] %v316
        %329 = vst [vmem:[%s191 + $0x10] sm:$0xff] %v325
        %330 = vst.msk [vmem:[%s191 + $0x18] sm:$0xff] %vm257, %v301
        %331 = vst [vmem:[%s191 + $0x20] sm:$0xff] %v311
        %332 = vst [vmem:[%s191 + $0x28] sm:$0xff] %v317
        %333 = vst [vmem:[%s191 + $0x30] sm:$0xff] %v326
        %334 = vst.msk [vmem:[%s191 + $0x38] sm:$0xff] %vm257, %v303
        %s335 = sand.u32 %s81, 1
        %s336 = scalar_lea.sflag [#allocation3], %s335
        %s337 = sand.u32 %s81, 1
        %s338 = smul.addr %s337, 16
        %s339 = scalar_lea.vmem [#allocation2], %s338
        %s340 = sand.u32 %s107, 1
        %s341 = scalar_lea.sflag [#allocation5], %s340
        %s342 = sand.u32 %s107, 1
        %s343 = smul.addr %s342, 64
        %s344 = scalar_lea.vmem [#allocation4], %s343
        // Predicated region
        $region29: #{tpu_custom_call.1} parent=27 // pred_check
          %p345 = pneg %p91
        $region30: #{tpu_custom_call.1} parent=27 // pred_check_branch
          %347 = sbr.rel (%p345) target = $region32
        $region31: #{tpu_custom_call.1} parent=27 // pred_region
          %s348 = smul.u32 2, %s21
          %350 = vsyncadd %s336, 0
          %s351 = smul.addr %s348, 8
          %s352 = scalar_lea.hbm %s2, %s351
          %s353 = sshll.u32 %s339, 4
          %s354 = int_to_ptr.vmem [resolvable:$true] %s353
          %s355 = sshll.u32 %s352, 4
          %s356 = int_to_ptr.hbm [resolvable:$true] %s355
          %361 = dma.vmem_to_hbm [thread:$0]  %s354, 256, %s356, %s336, 128, 128, 8
        $region32: #{tpu_custom_call.1} parent=27 // pred_fallthru
          _
        // Predicated region
        $region33: #{tpu_custom_call.1} parent=27 // pred_check
          %p362 = pneg %p117
        $region34: #{tpu_custom_call.1} parent=27 // pred_check_branch
          %364 = sbr.rel (%p362) target = $region36
        $region35: #{tpu_custom_call.1} parent=27 // pred_region
          %s365 = smul.u32 2, %s21
          %367 = vsyncadd %s341, 0
          %s368 = smul.addr %s365, 4
          %s369 = smul.addr %s368, 8
          %s370 = scalar_lea.hbm %s3, %s369
          %s371 = sshll.u32 %s344, 4
          %s372 = int_to_ptr.vmem [resolvable:$true] %s371
          %s373 = sshll.u32 %s370, 4
          %s374 = int_to_ptr.hbm [resolvable:$true] %s373
          %379 = dma.vmem_to_hbm [thread:$0]  %s372, 1024, %s374, %s341, 512, 512, 32
        $region36: #{tpu_custom_call.1} parent=27 // pred_fallthru
          _
      $region28: #{tpu_custom_call.1} parent=5 // pred_fallthru
        _
      %p380 = scmp.le.s32.totalorder 2, %s16
      // Predicated region
      $region37: #{tpu_custom_call.1} parent=5 // pred_check
        %p381 = pneg %p380
      $region38: #{tpu_custom_call.1} parent=5 // pred_check_branch
        %383 = sbr.rel (%p381) target = $region40
      $region39: #{tpu_custom_call.1} parent=5 // pred_region
        %s384 = ssub.s32 %s16, 2
        // Predicated region
        $region41: #{tpu_custom_call.1} parent=39 // pred_check
          %p385 = pneg %p97
        $region42: #{tpu_custom_call.1} parent=39 // pred_check_branch
          %387 = sbr.rel (%p385) target = $region44
        $region43: #{tpu_custom_call.1} parent=39 // pred_region
          %s388 = sand.u32 %s82, 1
          %s389 = scalar_lea.sflag [#allocation3], %s388
          %s390 = sand.u32 %s82, 1
          %s391 = smul.addr %s390, 16
          %s392 = scalar_lea.vmem [#allocation2], %s391
          %394 = dma.done %s389, 256
        $region44: #{tpu_custom_call.1} parent=39 // pred_fallthru
          _
        // Predicated region
        $region45: #{tpu_custom_call.1} parent=39 // pred_check
          %p395 = pneg %p123
        $region46: #{tpu_custom_call.1} parent=39 // pred_check_branch
          %397 = sbr.rel (%p395) target = $region48
        $region47: #{tpu_custom_call.1} parent=39 // pred_region
          %s398 = sand.u32 %s108, 1
          %s399 = scalar_lea.sflag [#allocation5], %s398
          %s400 = sand.u32 %s108, 1
          %s401 = smul.addr %s400, 64
          %s402 = scalar_lea.vmem [#allocation4], %s401
          %404 = dma.done %s399, 1024
        $region48: #{tpu_custom_call.1} parent=39 // pred_fallthru
          _
      $region40: #{tpu_custom_call.1} parent=5 // pred_fallthru
        _
    $region6: #{tpu_custom_call.1} parent=1 // loop_footer
      %s20 = sadd.s32 1, %s16
    $region7: #{tpu_custom_call.1} parent=1 // loop_footer_branch
      %15 = sbr.rel target = $region3
    $region8: #{tpu_custom_call.1} parent=1 // loop_exit
      _
    %405 = vsyncpa [#allocation3], 1
    %s406 = scalar_lea.sflag [#allocation3], 1
    %407 = vsyncpa %s406, 1
    %408 = vsyncpa [#allocation5], 1
    %s409 = scalar_lea.sflag [#allocation5], 1
    %410 = vsyncpa %s409, 1

</llo_original>
